<compile_context>
chip_gen: v7x
topology: tpu7x:2x2x1
jax: 0.10.0
libtpu: 0.0.40
codegen_flags: <defaults>
</compile_context>

<pallas_src>
import functools

import jax
import jax.numpy as jnp
from jax.experimental import pallas as pl
from jax.experimental.pallas import tpu as pltpu

INPUT_DIM = 3
HIDDEN_DIM = 32
OUTPUT_DIM = 2

SUBLANE = 8          # batch tile must be a multiple of 8 sublanes
MAX_BATCH_TILE = 512  # >=512-row tiles reach ~85% of HBM roofline; amortize step overhead


def _mlp_kernel(x_ref, w1_ref, b1_ref, w2_ref, b2_ref, w3_ref, b3_ref, o_ref,
                *, use_bf16_matmul: bool):
    """One batch tile: three MXU matmuls + VPU bias/ReLU, all in VMEM."""
    x = x_ref[...]
    w1, w2, w3 = w1_ref[...], w2_ref[...], w3_ref[...]
    if use_bf16_matmul:
        # bf16 operands on the MXU (f32 accumulation); epilogue stays f32 on the VPU.
        x, w1, w2, w3 = (a.astype(jnp.bfloat16) for a in (x, w1, w2, w3))

    h1 = jnp.maximum(
        jnp.dot(x, w1, preferred_element_type=jnp.float32) + b1_ref[...], 0.0)
    h2 = jnp.maximum(
        jnp.dot(h1.astype(w2.dtype), w2, preferred_element_type=jnp.float32)
        + b2_ref[...], 0.0)
    out = (jnp.dot(h2.astype(w3.dtype), w3, preferred_element_type=jnp.float32)
           + b3_ref[...])
    o_ref[...] = out.astype(o_ref.dtype)


def _round_up(n, m):
    return ((n + m - 1) // m) * m


@functools.partial(jax.jit, static_argnames=("use_bf16_matmul",))
def policy_network_forward(x, params, use_bf16_matmul=False):
    """x: [B, 3] float32 -> logits [B, 2] float32."""
    w1, b1, w2, b2, w3, b3 = params
    x = x.astype(jnp.float32)
    B = x.shape[0]

    # Batch tile: whole batch if small, else 512-row tiles (pipelined grid).
    tb = min(MAX_BATCH_TILE, _round_up(max(B, 1), SUBLANE))
    Bp = _round_up(B, tb)
    if Bp != B:
        x = jnp.pad(x, ((0, Bp - B), (0, 0)))   # batch-only zero pad (exact)

    grid = (Bp // tb,)

    kernel = functools.partial(_mlp_kernel, use_bf16_matmul=use_bf16_matmul)
    const = lambda shape: pl.BlockSpec(shape, lambda i: (0, 0))  # VMEM-resident params

    out = pl.pallas_call(
        kernel,
        out_shape=jax.ShapeDtypeStruct((Bp, OUTPUT_DIM), jnp.float32),
        grid=grid,
        in_specs=[
            pl.BlockSpec((tb, INPUT_DIM), lambda i: (i, 0)),     # x: true 3-wide feature dim
            const((INPUT_DIM, HIDDEN_DIM)), const((1, HIDDEN_DIM)),
            const((HIDDEN_DIM, HIDDEN_DIM)), const((1, HIDDEN_DIM)),
            const((HIDDEN_DIM, OUTPUT_DIM)), const((1, OUTPUT_DIM)),
        ],
        out_specs=pl.BlockSpec((tb, OUTPUT_DIM), lambda i: (i, 0)),  # true 2-wide output
        compiler_params=pltpu.CompilerParams(
            dimension_semantics=("parallel",),   # megacore sharding on v7x
        ),
    )(x, w1, b1[None, :], w2, b2[None, :], w3, b3[None, :])

    return out[:B] if Bp != B else out


def init_params(key):
    """Xavier-uniform weights / zero biases, matching PolicyNetwork._init_weights."""
    def xavier(k, fan_in, fan_out):
        bound = (6.0 / (fan_in + fan_out)) ** 0.5
        # stored [in, out] so the kernel computes x @ W (PyTorch stores [out, in])
        return jax.random.uniform(
            k, (fan_in, fan_out), jnp.float32, minval=-bound, maxval=bound)

    k1, k2, k3 = jax.random.split(key, 3)
    return (
        xavier(k1, INPUT_DIM, HIDDEN_DIM), jnp.zeros((HIDDEN_DIM,), jnp.float32),
        xavier(k2, HIDDEN_DIM, HIDDEN_DIM), jnp.zeros((HIDDEN_DIM,), jnp.float32),
        xavier(k3, HIDDEN_DIM, OUTPUT_DIM), jnp.zeros((OUTPUT_DIM,), jnp.float32),
    )


def reference_forward(x, params):
    w1, b1, w2, b2, w3, b3 = params
    h1 = jnp.maximum(x @ w1 + b1, 0.0)
    h2 = jnp.maximum(h1 @ w2 + b2, 0.0)
    return h2 @ w3 + b3


if __name__ == "__main__":
    key = jax.random.PRNGKey(0)
    pkey, xkey, xkey2 = jax.random.split(key, 3)

    params = init_params(pkey)

    # Small batch of normalized [S, t, PDE_price] states (single-tile path).
    x_small = jax.random.normal(xkey, (8, INPUT_DIM), dtype=jnp.float32)
    logits = policy_network_forward(x_small, params)
    jax.block_until_ready(logits)
    assert logits.shape == (8, OUTPUT_DIM)
    assert jnp.allclose(logits, reference_forward(x_small, params),
                        atol=1e-5, rtol=1e-5), "Pallas mismatch (small batch)"

    # Larger, non-tile-multiple batch exercises the gridded + batch-padded path.
    x_big = jax.random.normal(xkey2, (1000, INPUT_DIM), dtype=jnp.float32)
    logits_big = policy_network_forward(x_big, params)
    jax.block_until_ready(logits_big)
    assert logits_big.shape == (1000, OUTPUT_DIM)
    assert jnp.allclose(logits_big, reference_forward(x_big, params),
                        atol=1e-5, rtol=1e-5), "Pallas mismatch (gridded batch)"

    print("KERNEL_OK")
</pallas_src>

<mosaic_0001>
module attributes {stable_mosaic.version = 11 : i64} {
  func.func @_mlp_kernel(%arg0: i32, %arg1: memref<8x3xf32, #tpu.memory_space<vmem>>, %arg2: memref<3x32xf32, #tpu.memory_space<vmem>>, %arg3: memref<1x32xf32, #tpu.memory_space<vmem>>, %arg4: memref<32x32xf32, #tpu.memory_space<vmem>>, %arg5: memref<1x32xf32, #tpu.memory_space<vmem>>, %arg6: memref<32x2xf32, #tpu.memory_space<vmem>>, %arg7: memref<1x2xf32, #tpu.memory_space<vmem>>, %arg8: memref<8x2xf32, #tpu.memory_space<vmem>>) attributes {dimension_semantics = [#tpu.dimension_semantics<parallel>], iteration_bounds = array<i64: 1>, scalar_prefetch = 0 : i64, scratch_operands = 0 : i64, tpu.core_type = #tpu.core_type<tc>, window_params = [{transform_indices = @transform_0, window_bounds = array<i64: 8, 3>}, {pipeline_mode = #tpu.pipeline_mode<synchronous>, transform_indices = @transform_1, window_bounds = array<i64: 3, 32>}, {pipeline_mode = #tpu.pipeline_mode<synchronous>, transform_indices = @transform_2, window_bounds = array<i64: 1, 32>}, {pipeline_mode = #tpu.pipeline_mode<synchronous>, transform_indices = @transform_3, window_bounds = array<i64: 32, 32>}, {pipeline_mode = #tpu.pipeline_mode<synchronous>, transform_indices = @transform_4, window_bounds = array<i64: 1, 32>}, {pipeline_mode = #tpu.pipeline_mode<synchronous>, transform_indices = @transform_5, window_bounds = array<i64: 32, 2>}, {pipeline_mode = #tpu.pipeline_mode<synchronous>, transform_indices = @transform_6, window_bounds = array<i64: 1, 2>}, {transform_indices = @transform_7, window_bounds = array<i64: 8, 2>}]} {
    %c0 = arith.constant 0 : index
    %c0_0 = arith.constant 0 : index
    %0 = vector.load %arg1[%c0, %c0_0] : memref<8x3xf32, #tpu.memory_space<vmem>>, vector<8x3xf32>
    %c0_1 = arith.constant 0 : index
    %c0_2 = arith.constant 0 : index
    %1 = vector.load %arg2[%c0_1, %c0_2] : memref<3x32xf32, #tpu.memory_space<vmem>>, vector<3x32xf32>
    %c0_3 = arith.constant 0 : index
    %c0_4 = arith.constant 0 : index
    %2 = vector.load %arg4[%c0_3, %c0_4] : memref<32x32xf32, #tpu.memory_space<vmem>>, vector<32x32xf32>
    %c0_5 = arith.constant 0 : index
    %c0_6 = arith.constant 0 : index
    %3 = vector.load %arg6[%c0_5, %c0_6] : memref<32x2xf32, #tpu.memory_space<vmem>>, vector<32x2xf32>
    %cst = arith.constant dense<0.000000e+00> : vector<8x32xf32>
    %4 = tpu.matmul %0, %1, %cst {dimension_numbers = #tpu.dot_dimension_numbers<[1], [0], [0], [1], [0, 0, 1, 1], [], []>} : vector<8x3xf32>, vector<3x32xf32>, vector<8x32xf32> -> vector<8x32xf32>
    %c0_7 = arith.constant 0 : index
    %c0_8 = arith.constant 0 : index
    %5 = vector.load %arg3[%c0_7, %c0_8] : memref<1x32xf32, #tpu.memory_space<vmem>>, vector<1x32xf32>
    %6 = vector.broadcast %5 : vector<1x32xf32> to vector<8x32xf32>
    %7 = arith.addf %4, %6 : vector<8x32xf32>
    %cst_9 = arith.constant 0.000000e+00 : f32
    %8 = vector.broadcast %cst_9 : f32 to vector<8x32xf32>
    %9 = arith.maximumf %7, %8 : vector<8x32xf32>
    %cst_10 = arith.constant dense<0.000000e+00> : vector<8x32xf32>
    %10 = tpu.matmul %9, %2, %cst_10 {dimension_numbers = #tpu.dot_dimension_numbers<[1], [0], [0], [1], [0, 0, 1, 1], [], []>} : vector<8x32xf32>, vector<32x32xf32>, vector<8x32xf32> -> vector<8x32xf32>
    %c0_11 = arith.constant 0 : index
    %c0_12 = arith.constant 0 : index
    %11 = vector.load %arg5[%c0_11, %c0_12] : memref<1x32xf32, #tpu.memory_space<vmem>>, vector<1x32xf32>
    %12 = vector.broadcast %11 : vector<1x32xf32> to vector<8x32xf32>
    %13 = arith.addf %10, %12 : vector<8x32xf32>
    %cst_13 = arith.constant 0.000000e+00 : f32
    %14 = vector.broadcast %cst_13 : f32 to vector<8x32xf32>
    %15 = arith.maximumf %13, %14 : vector<8x32xf32>
    %cst_14 = arith.constant dense<0.000000e+00> : vector<8x2xf32>
    %16 = tpu.matmul %15, %3, %cst_14 {dimension_numbers = #tpu.dot_dimension_numbers<[1], [0], [0], [1], [0, 0, 1, 1], [], []>} : vector<8x32xf32>, vector<32x2xf32>, vector<8x2xf32> -> vector<8x2xf32>
    %c0_15 = arith.constant 0 : index
    %c0_16 = arith.constant 0 : index
    %17 = vector.load %arg7[%c0_15, %c0_16] : memref<1x2xf32, #tpu.memory_space<vmem>>, vector<1x2xf32>
    %18 = vector.broadcast %17 : vector<1x2xf32> to vector<8x2xf32>
    %19 = arith.addf %16, %18 : vector<8x2xf32>
    %c0_17 = arith.constant 0 : index
    %c0_18 = arith.constant 0 : index
    %20 = vector.load %arg8[%c0_17, %c0_18] : memref<8x2xf32, #tpu.memory_space<vmem>>, vector<8x2xf32>
    tpu.vector_store %arg8[%c0_17, %c0_18], %19 {strides = array<i32>} : memref<8x2xf32, #tpu.memory_space<vmem>>, vector<8x2xf32>,
    return
  }
  func.func @transform_0(%arg0: i32) -> (i32, i32) {
    %c0_i32 = arith.constant 0 : i32
    %c0_i32_0 = arith.constant 0 : i32
    return %arg0, %c0_i32 : i32, i32
  }
  func.func @transform_1(%arg0: i32) -> (i32, i32) {
    %c0_i32 = arith.constant 0 : i32
    %c0_i32_0 = arith.constant 0 : i32
    %c0_i32_1 = arith.constant 0 : i32
    return %c0_i32, %c0_i32_0 : i32, i32
  }
  func.func @transform_2(%arg0: i32) -> (i32, i32) {
    %c0_i32 = arith.constant 0 : i32
    %c0_i32_0 = arith.constant 0 : i32
    %c0_i32_1 = arith.constant 0 : i32
    return %c0_i32, %c0_i32_0 : i32, i32
  }
  func.func @transform_3(%arg0: i32) -> (i32, i32) {
    %c0_i32 = arith.constant 0 : i32
    %c0_i32_0 = arith.constant 0 : i32
    %c0_i32_1 = arith.constant 0 : i32
    return %c0_i32, %c0_i32_0 : i32, i32
  }
  func.func @transform_4(%arg0: i32) -> (i32, i32) {
    %c0_i32 = arith.constant 0 : i32
    %c0_i32_0 = arith.constant 0 : i32
    %c0_i32_1 = arith.constant 0 : i32
    return %c0_i32, %c0_i32_0 : i32, i32
  }
  func.func @transform_5(%arg0: i32) -> (i32, i32) {
    %c0_i32 = arith.constant 0 : i32
    %c0_i32_0 = arith.constant 0 : i32
    %c0_i32_1 = arith.constant 0 : i32
    return %c0_i32, %c0_i32_0 : i32, i32
  }
  func.func @transform_6(%arg0: i32) -> (i32, i32) {
    %c0_i32 = arith.constant 0 : i32
    %c0_i32_0 = arith.constant 0 : i32
    %c0_i32_1 = arith.constant 0 : i32
    return %c0_i32, %c0_i32_0 : i32, i32
  }
  func.func @transform_7(%arg0: i32) -> (i32, i32) {
    %c0_i32 = arith.constant 0 : i32
    %c0_i32_0 = arith.constant 0 : i32
    return %arg0, %c0_i32 : i32, i32
  }
}

</mosaic_0001>

<llo_original>
// kernel: policy_network_forward.1
$region0: #{policy_network_forward.1}
  #allocation0 [shape = 'u32[]', space=smem, size = 0x4, offset = 0x4, fixed_abs, tag = 'smem constant byte address 0x4 - core index']
  #allocation1 [shape = 'u32[144,128]{1,0:T(1,128)}', space=vmem, size = 0x12000, scoped, tag = 'internal scratch']
  %s0 = inlined_call_operand.vmem [shape: f32[8,3], index: 0, kind: input, shape index: {}]
  %s1 = inlined_call_operand.vmem [shape: f32[3,32], index: 1, kind: input, shape index: {}]
  %s2 = inlined_call_operand.vmem [shape: f32[1,32], index: 2, kind: input, shape index: {}]
  %s3 = inlined_call_operand.vmem [shape: f32[32,32], index: 3, kind: input, shape index: {}]
  %s4 = inlined_call_operand.vmem [shape: f32[1,32], index: 4, kind: input, shape index: {}]
  %s5 = inlined_call_operand.vmem [shape: f32[32,2], index: 5, kind: input, shape index: {}]
  %s6 = inlined_call_operand.vmem [shape: f32[1,2], index: 6, kind: input, shape index: {}]
  %s7 = inlined_call_operand.vmem [shape: f32[8,2], index: 7, kind: output, shape index: {}]
  %s8 = sld [smem:[#allocation0]]
  $region38: #{policy_network_forward.1} parent=0
    _
  %s10 = ssub.s32 1, %s8
  %s11 = scalar_select 0, %s10, %s8
  // Predicated region
  $region2: #{policy_network_forward.1} parent=0 // pred_check
    _
  $region3: #{policy_network_forward.1} parent=0 // pred_check_branch
    %13 = sbr.rel (0) target = $region5
  $region4: #{policy_network_forward.1} parent=0 // pred_region
    _
  $region5: #{policy_network_forward.1} parent=0 // pred_fallthru
    _
  // Predicated region
  $region6: #{policy_network_forward.1} parent=0 // pred_check
    _
  $region7: #{policy_network_forward.1} parent=0 // pred_check_branch
    %15 = sbr.rel (0) target = $region9
  $region8: #{policy_network_forward.1} parent=0 // pred_region
    _
  $region9: #{policy_network_forward.1} parent=0 // pred_fallthru
    _
  // Predicated region
  $region10: #{policy_network_forward.1} parent=0 // pred_check
    _
  $region11: #{policy_network_forward.1} parent=0 // pred_check_branch
    %17 = sbr.rel (0) target = $region13
  $region12: #{policy_network_forward.1} parent=0 // pred_region
    _
  $region13: #{policy_network_forward.1} parent=0 // pred_fallthru
    _
  // Predicated region
  $region14: #{policy_network_forward.1} parent=0 // pred_check
    _
  $region15: #{policy_network_forward.1} parent=0 // pred_check_branch
    %19 = sbr.rel (0) target = $region17
  $region16: #{policy_network_forward.1} parent=0 // pred_region
    _
  $region17: #{policy_network_forward.1} parent=0 // pred_fallthru
    _
  // Predicated region
  $region18: #{policy_network_forward.1} parent=0 // pred_check
    _
  $region19: #{policy_network_forward.1} parent=0 // pred_check_branch
    %21 = sbr.rel (0) target = $region21
  $region20: #{policy_network_forward.1} parent=0 // pred_region
    _
  $region21: #{policy_network_forward.1} parent=0 // pred_fallthru
    _
  // Predicated region
  $region22: #{policy_network_forward.1} parent=0 // pred_check
    _
  $region23: #{policy_network_forward.1} parent=0 // pred_check_branch
    %23 = sbr.rel (0) target = $region25
  $region24: #{policy_network_forward.1} parent=0 // pred_region
    _
  $region25: #{policy_network_forward.1} parent=0 // pred_fallthru
    _
  // Predicated region
  $region26: #{policy_network_forward.1} parent=0 // pred_check
    _
  $region27: #{policy_network_forward.1} parent=0 // pred_check_branch
    %25 = sbr.rel (0) target = $region29
  $region28: #{policy_network_forward.1} parent=0 // pred_region
    _
  $region29: #{policy_network_forward.1} parent=0 // pred_fallthru
    _
  %v26 = vld [vmem:[%s0] sm:$0xff]
  %v27 = vld [vmem:[%s1] sm:$0x7]
  %v28 = vld [vmem:[%s3] sm:$0xff]
  %v29 = vld [vmem:[%s3 + $0x8] sm:$0xff]
  %v30 = vld [vmem:[%s3 + $0x10] sm:$0xff]
  %v31 = vld [vmem:[%s3 + $0x18] sm:$0xff]
  %v32 = vld [vmem:[%s5] sm:$0xff]
  %v33 = vld [vmem:[%s5 + $0x8] sm:$0xff]
  %v34 = vld [vmem:[%s5 + $0x10] sm:$0xff]
  %v35 = vld [vmem:[%s5 + $0x18] sm:$0xff]
  %v36 = vld [vmem:[%s2] sm:$0x1]
  %v38 = vlaneseq
  %v39 = vshrl.u32 %v38, 7
  %v40 = vsub.s32 0, %v39
  %v41 = vrot.slane %v36, %v40
  %vm43 = vcmask 23552
  %v45 = vsel %vm43, %v26, 0
  %vm47 = vcmask 1042432
  %v49 = vsel %vm47, %v27, 0
  %51 = vmatprep.subr.mxu0 0.0
  %52 = vmatpush1.msra.mxu0 %v49
  %53 = vmatprep.subr.mxu0 0.0
  %54 = vmatpush1.msra.mxu0 0.0
  %55 = vmatprep.subr.mxu0 0.0
  %56 = vmatpush1.msra.mxu0 0.0
  %57 = vmatprep.subr.mxu0 0.0
  %58 = vmatpush1.msra.mxu0 0.0
  %59 = vmatprep.subr.mxu0 0.0
  %60 = vmatpush1.msra.mxu0 0.0
  %61 = vmatprep.subr.mxu0 0.0
  %62 = vmatpush1.msra.mxu0 0.0
  %63 = vmatprep.subr.mxu0 0.0
  %64 = vmatpush1.msra.mxu0 0.0
  %65 = vmatprep.subr.mxu0 0.0
  %66 = vmatpush1.msra.mxu0 0.0
  %67 = vmatprep.subr.mxu0 0.0
  %68 = vmatpush1.msra.mxu0 0.0
  %69 = vmatprep.subr.mxu0 0.0
  %70 = vmatpush1.msra.mxu0 0.0
  %71 = vmatprep.subr.mxu0 0.0
  %72 = vmatpush1.msra.mxu0 0.0
  %73 = vmatprep.subr.mxu0 0.0
  %74 = vmatpush1.msra.mxu0 0.0
  %75 = vmatprep.subr.mxu0 0.0
  %76 = vmatpush1.msra.mxu0 0.0
  %77 = vmatprep.subr.mxu0 0.0
  %78 = vmatpush1.msra.mxu0 0.0
  %79 = vmatprep.subr.mxu0 0.0
  %80 = vmatpush1.msra.mxu0 0.0
  %81 = vmatprep.subr.mxu0 0.0
  %82 = vmatpush1.msra.mxu0 0.0
  %83 = vmatprep.subr.mxu0 0.0
  %84 = vmatpush1.msra.mxu0 0.0
  %85 = vmatprep.subr.mxu0 0.0
  %86 = vmatpush1.msra.mxu0 0.0
  %87 = vmatprep.subr.mxu0 0.0
  %88 = vmatpush1.msra.mxu0 0.0
  %89 = vmatprep.subr.mxu0 0.0
  %90 = vmatpush1.msra.mxu0 0.0
  %91 = vmatprep.subr.mxu0 0.0
  %92 = vmatpush1.msra.mxu0 0.0
  %93 = vmatprep.subr.mxu0 0.0
  %94 = vmatpush1.msra.mxu0 0.0
  %95 = vmatprep.subr.mxu0 0.0
  %96 = vmatpush1.msra.mxu0 0.0
  %97 = vmatprep.subr.mxu0 0.0
  %98 = vmatpush1.msra.mxu0 0.0
  %99 = vmatprep.subr.mxu0 0.0
  %100 = vmatpush1.msra.mxu0 0.0
  %101 = vmatprep.subr.mxu0 0.0
  %102 = vmatpush1.msra.mxu0 0.0
  %103 = vmatprep.subr.mxu0 0.0
  %104 = vmatpush1.msra.mxu0 0.0
  %105 = vmatprep.subr.mxu0 0.0
  %106 = vmatpush1.msra.mxu0 0.0
  %107 = vmatprep.subr.mxu0 0.0
  %108 = vmatpush1.msra.mxu0 0.0
  %109 = vmatprep.subr.mxu0 0.0
  %110 = vmatpush1.msra.mxu0 0.0
  %111 = vmatprep.subr.mxu0 0.0
  %112 = vmatpush1.msra.mxu0 0.0
  %113 = vmatprep.subr.mxu0 0.0
  %114 = vmatpush1.msra.mxu0 0.0
  %115 = vmatprep.mubr.f32.mxu0 0.0
  %116 = vmatmul.mubr.f32.gmra.mrb[0].mxu0 %v45
  %v117 = vpop.f32.mrb[0].mxu0
  %v118 = vadd.f32 %v41, %v117
  %v119 = vpop.f32.mrb[0].mxu0
  %120 = vdwg.mxu0
  %v121 = vmax.f32 %v118, 0.0
  %v122 = vld [vmem:[%s4] sm:$0x1]
  %v124 = vlaneseq
  %v125 = vshrl.u32 %v124, 7
  %v126 = vsub.s32 0, %v125
  %v127 = vrot.slane %v122, %v126
  %vm129 = vcmask 261120
  %v131 = vsel %vm129, %v121, 0
  %133 = vmatprep.subr.mxu0 0.0
  %134 = vmatpush1.msra.mxu0 %v28
  %135 = vmatprep.subr.mxu0 0.0
  %136 = vmatpush1.msra.mxu0 %v29
  %137 = vmatprep.subr.mxu0 0.0
  %138 = vmatpush1.msra.mxu0 %v30
  %139 = vmatprep.subr.mxu0 0.0
  %140 = vmatpush1.msra.mxu0 %v31
  %141 = vmatprep.subr.mxu0 0.0
  %142 = vmatpush1.msra.mxu0 0.0
  %143 = vmatprep.subr.mxu0 0.0
  %144 = vmatpush1.msra.mxu0 0.0
  %145 = vmatprep.subr.mxu0 0.0
  %146 = vmatpush1.msra.mxu0 0.0
  %147 = vmatprep.subr.mxu0 0.0
  %148 = vmatpush1.msra.mxu0 0.0
  %149 = vmatprep.subr.mxu0 0.0
  %150 = vmatpush1.msra.mxu0 0.0
  %151 = vmatprep.subr.mxu0 0.0
  %152 = vmatpush1.msra.mxu0 0.0
  %153 = vmatprep.subr.mxu0 0.0
  %154 = vmatpush1.msra.mxu0 0.0
  %155 = vmatprep.subr.mxu0 0.0
  %156 = vmatpush1.msra.mxu0 0.0
  %157 = vmatprep.subr.mxu0 0.0
  %158 = vmatpush1.msra.mxu0 0.0
  %159 = vmatprep.subr.mxu0 0.0
  %160 = vmatpush1.msra.mxu0 0.0
  %161 = vmatprep.subr.mxu0 0.0
  %162 = vmatpush1.msra.mxu0 0.0
  %163 = vmatprep.subr.mxu0 0.0
  %164 = vmatpush1.msra.mxu0 0.0
  %165 = vmatprep.subr.mxu0 0.0
  %166 = vmatpush1.msra.mxu0 0.0
  %167 = vmatprep.subr.mxu0 0.0
  %168 = vmatpush1.msra.mxu0 0.0
  %169 = vmatprep.subr.mxu0 0.0
  %170 = vmatpush1.msra.mxu0 0.0
  %171 = vmatprep.subr.mxu0 0.0
  %172 = vmatpush1.msra.mxu0 0.0
  %173 = vmatprep.subr.mxu0 0.0
  %174 = vmatpush1.msra.mxu0 0.0
  %175 = vmatprep.subr.mxu0 0.0
  %176 = vmatpush1.msra.mxu0 0.0
  %177 = vmatprep.subr.mxu0 0.0
  %178 = vmatpush1.msra.mxu0 0.0
  %179 = vmatprep.subr.mxu0 0.0
  %180 = vmatpush1.msra.mxu0 0.0
  %181 = vmatprep.subr.mxu0 0.0
  %182 = vmatpush1.msra.mxu0 0.0
  %183 = vmatprep.subr.mxu0 0.0
  %184 = vmatpush1.msra.mxu0 0.0
  %185 = vmatprep.subr.mxu0 0.0
  %186 = vmatpush1.msra.mxu0 0.0
  %187 = vmatprep.subr.mxu0 0.0
  %188 = vmatpush1.msra.mxu0 0.0
  %189 = vmatprep.subr.mxu0 0.0
  %190 = vmatpush1.msra.mxu0 0.0
  %191 = vmatprep.subr.mxu0 0.0
  %192 = vmatpush1.msra.mxu0 0.0
  %193 = vmatprep.subr.mxu0 0.0
  %194 = vmatpush1.msra.mxu0 0.0
  %195 = vmatprep.subr.mxu0 0.0
  %196 = vmatpush1.msra.mxu0 0.0
  %197 = vmatprep.mubr.f32.mxu0 0.0
  %198 = vmatmul.mubr.f32.gmra.mrb[0].mxu0 %v131
  %v199 = vpop.f32.mrb[0].mxu0
  %v200 = vadd.f32 %v127, %v199
  %v201 = vpop.f32.mrb[0].mxu0
  %202 = vdwg.mxu0
  %v203 = vmax.f32 %v200, 0.0
  %v204 = vld [vmem:[%s6] sm:$0x1]
  %v206 = vlaneseq
  %v207 = vshrl.u32 %v206, 7
  %v208 = vsub.s32 0, %v207
  %v209 = vrot.slane %v204, %v208
  %v212 = vsel %vm129, %v203, 0
  %214 = vmatprep.subr.mxu0 0.0
  %215 = vmatpush1.msra.mxu0 %v32
  %216 = vmatprep.subr.mxu0 0.0
  %217 = vmatpush1.msra.mxu0 %v33
  %218 = vmatprep.subr.mxu0 0.0
  %219 = vmatpush1.msra.mxu0 %v34
  %220 = vmatprep.subr.mxu0 0.0
  %221 = vmatpush1.msra.mxu0 %v35
  %222 = vmatprep.subr.mxu0 0.0
  %223 = vmatpush1.msra.mxu0 0.0
  %224 = vmatprep.subr.mxu0 0.0
  %225 = vmatpush1.msra.mxu0 0.0
  %226 = vmatprep.subr.mxu0 0.0
  %227 = vmatpush1.msra.mxu0 0.0
  %228 = vmatprep.subr.mxu0 0.0
  %229 = vmatpush1.msra.mxu0 0.0
  %230 = vmatprep.subr.mxu0 0.0
  %231 = vmatpush1.msra.mxu0 0.0
  %232 = vmatprep.subr.mxu0 0.0
  %233 = vmatpush1.msra.mxu0 0.0
  %234 = vmatprep.subr.mxu0 0.0
  %235 = vmatpush1.msra.mxu0 0.0
  %236 = vmatprep.subr.mxu0 0.0
  %237 = vmatpush1.msra.mxu0 0.0
  %238 = vmatprep.subr.mxu0 0.0
  %239 = vmatpush1.msra.mxu0 0.0
  %240 = vmatprep.subr.mxu0 0.0
  %241 = vmatpush1.msra.mxu0 0.0
  %242 = vmatprep.subr.mxu0 0.0
  %243 = vmatpush1.msra.mxu0 0.0
  %244 = vmatprep.subr.mxu0 0.0
  %245 = vmatpush1.msra.mxu0 0.0
  %246 = vmatprep.subr.mxu0 0.0
  %247 = vmatpush1.msra.mxu0 0.0
  %248 = vmatprep.subr.mxu0 0.0
  %249 = vmatpush1.msra.mxu0 0.0
  %250 = vmatprep.subr.mxu0 0.0
  %251 = vmatpush1.msra.mxu0 0.0
  %252 = vmatprep.subr.mxu0 0.0
  %253 = vmatpush1.msra.mxu0 0.0
  %254 = vmatprep.subr.mxu0 0.0
  %255 = vmatpush1.msra.mxu0 0.0
  %256 = vmatprep.subr.mxu0 0.0
  %257 = vmatpush1.msra.mxu0 0.0
  %258 = vmatprep.subr.mxu0 0.0
  %259 = vmatpush1.msra.mxu0 0.0
  %260 = vmatprep.subr.mxu0 0.0
  %261 = vmatpush1.msra.mxu0 0.0
  %262 = vmatprep.subr.mxu0 0.0
  %263 = vmatpush1.msra.mxu0 0.0
  %264 = vmatprep.subr.mxu0 0.0
  %265 = vmatpush1.msra.mxu0 0.0
  %266 = vmatprep.subr.mxu0 0.0
  %267 = vmatpush1.msra.mxu0 0.0
  %268 = vmatprep.subr.mxu0 0.0
  %269 = vmatpush1.msra.mxu0 0.0
  %270 = vmatprep.subr.mxu0 0.0
  %271 = vmatpush1.msra.mxu0 0.0
  %272 = vmatprep.subr.mxu0 0.0
  %273 = vmatpush1.msra.mxu0 0.0
  %274 = vmatprep.subr.mxu0 0.0
  %275 = vmatpush1.msra.mxu0 0.0
  %276 = vmatprep.subr.mxu0 0.0
  %277 = vmatpush1.msra.mxu0 0.0
  %278 = vmatprep.mubr.f32.mxu0 0.0
  %279 = vmatmul.mubr.f32.gmra.mrb[0].mxu0 %v212
  %v280 = vpop.f32.mrb[0].mxu0
  %v281 = vadd.f32 %v209, %v280
  %v282 = vpop.f32.mrb[0].mxu0
  %283 = vdwg.mxu0
  %vm284 = vcmask 15360
  %285 = vst.msk [vmem:[%s7] sm:$0xff] %vm284, %v281
  // Predicated region
  $region30: #{policy_network_forward.1} parent=0 // pred_check
    _
  $region31: #{policy_network_forward.1} parent=0 // pred_check_branch
    %287 = sbr.rel (0) target = $region33
  $region32: #{policy_network_forward.1} parent=0 // pred_region
    _
  $region33: #{policy_network_forward.1} parent=0 // pred_fallthru
    _
  // Predicated region
  $region34: #{policy_network_forward.1} parent=0 // pred_check
    _
  $region35: #{policy_network_forward.1} parent=0 // pred_check_branch
    %289 = sbr.rel (0) target = $region37
  $region36: #{policy_network_forward.1} parent=0 // pred_region
    _
  $region37: #{policy_network_forward.1} parent=0 // pred_fallthru
    _

</llo_original>
